<compile_context>
chip_gen: v7x
topology: tpu7x:2x2x1
jax: 0.10.0
libtpu: 0.0.40
codegen_flags: <defaults>
</compile_context>

<pallas_src>
import functools

import jax
import jax.numpy as jnp
from jax.experimental import pallas as pl
from jax.experimental.pallas import tpu as pltpu


def _round_up(x: int, m: int) -> int:
    return ((x + m - 1) // m) * m


def _mlp_fused_kernel(*refs, n_layers: int):
    """Fused MLP forward on one batch tile.

    refs = (x_ref, w0_ref, b0_ref, w1_ref, b1_ref, ..., o_ref)
      x_ref : (TILE_B, K0p)   f32  VMEM
      wi_ref: (Kip, Nip)      bf16 VMEM (pre-transposed, N padded to 128)
      bi_ref: (1, Nip)        f32  VMEM
      o_ref : (TILE_B, NLp)   f32  VMEM
    """
    x_ref = refs[0]
    o_ref = refs[-1]

    y = x_ref[...].astype(jnp.bfloat16)  # VPU cast -> bf16 feeds the MXU
    for i in range(n_layers):
        w = refs[1 + 2 * i][...]
        b = refs[2 + 2 * i][...]
        # MXU bf16 matmul with f32 accumulation; bias add (VPU) broadcasts the
        # (1, N) row in f32.
        acc = jnp.dot(y, w, preferred_element_type=jnp.float32) + b
        if i < n_layers - 1:
            # TODO(synk): Dropout(p=0.3) is identity here (eval mode); training
            # would draw a mask via pltpu.prng_random_bits and scale by 1/(1-p).
            acc = jnp.tanh(acc)                # EUP transcendental, f32
            y = acc.astype(jnp.bfloat16)       # back to bf16 for next matmul
        else:
            o_ref[...] = acc.astype(o_ref.dtype)


def _mlp_reference_jnp(x, padded_params):
    """Plain-JAX mirror of the kernel math on the padded bf16 parameters."""
    n = len(padded_params)
    y = x.astype(jnp.bfloat16)
    out = None
    for i, (w, b) in enumerate(padded_params):
        acc = jnp.dot(y, w, preferred_element_type=jnp.float32) + b
        if i < n - 1:
            y = jnp.tanh(acc).astype(jnp.bfloat16)
        else:
            out = acc
    return out


def _choose_tiling(B: int, max_tile_b: int):
    """Balanced batch tiles; alignment grows with B so MXU M rows fill."""
    if B >= 2048:
        align = 256     # v6e/v7x MXU is 256-wide
    elif B >= 256:
        align = 128
    elif B >= 16:
        align = 16      # bf16 sublane packing
    else:
        align = 8
    num_tiles = pl.cdiv(B, max_tile_b)
    if num_tiles == 1 and B >= 2 * align:
        num_tiles = 2   # let v7x's two TensorCores each take a batch tile
    tile_b = _round_up(pl.cdiv(B, num_tiles), align)
    num_tiles = pl.cdiv(B, tile_b)
    return tile_b, num_tiles


def mlp_forward(x, padded_params, out_dim, *, max_tile_b: int = 512):
    """Run the fused MLP kernel. x: (B, d_in) f32. Returns (B, out_dim) f32."""
    B, d_in = x.shape
    d_in_pad = padded_params[0][0].shape[0]
    d_out_pad = padded_params[-1][0].shape[1]
    n_layers = len(padded_params)

    # The first layer's contraction dim is only padded up to a multiple of 16
    # (bf16 packing), so this copy is usually a no-op.
    if d_in_pad != d_in:
        x = jnp.zeros((B, d_in_pad), x.dtype).at[:, :d_in].set(x)

    tile_b, num_tiles = _choose_tiling(B, max_tile_b)

    flat_params = [p for pair in padded_params for p in pair]
    param_bytes = sum(
        int(w.size) * w.dtype.itemsize + int(b.size) * b.dtype.itemsize
        for w, b in padded_params
    )
    max_feat = max([d_in_pad] + [w.shape[1] for w, _ in padded_params])

    def est_vmem(weight_bufs: int) -> int:
        io_tiles = 2 * tile_b * (d_in_pad + d_out_pad) * 4   # double-buffered x / out (f32)
        acts = 2 * tile_b * max_feat * (4 + 2)                # f32 + bf16 intermediates (rough)
        return weight_bufs * param_bytes + io_tiles + acts + (2 << 20)  # + Mosaic scratch margin

    try:
        phys_vmem = int(pltpu.get_tpu_info().vmem_capacity_bytes)
    except Exception:
        phys_vmem = 64 * 1024 * 1024     # worst case: v7x per-TensorCore VMEM
    budget = int(phys_vmem * 0.85)       # leave headroom for compiler scratch/semaphores

    if est_vmem(1) > budget:
        # TODO(synk): K/N-tile the largest layer (extra grid axis + f32
        # accumulator + pl.when) instead of keeping every weight resident;
        # plain-JAX fallback keeps correctness for oversized weight sets.
        out = _mlp_reference_jnp(x, padded_params)
        return out if d_out_pad == out_dim else out[:, :out_dim]

    def build_and_run(single_buffer_weights: bool):
        if single_buffer_weights:
            # Weights/biases never change across batch tiles (constant (0,0)
            # index_map) -> one VMEM buffer is enough.
            w_kwargs = dict(pipeline_mode=pl.Buffered(1))
            weight_bufs = 1
        else:
            w_kwargs = {}
            weight_bufs = 2

        in_specs = [pl.BlockSpec((tile_b, d_in_pad), lambda i: (i, 0))]
        for w_p, b_p in padded_params:
            in_specs.append(pl.BlockSpec(w_p.shape, lambda i: (0, 0), **w_kwargs))
            in_specs.append(pl.BlockSpec(b_p.shape, lambda i: (0, 0), **w_kwargs))
        out_spec = pl.BlockSpec((tile_b, d_out_pad), lambda i: (i, 0))

        kernel = functools.partial(_mlp_fused_kernel, n_layers=n_layers)
        return pl.pallas_call(
            kernel,
            out_shape=jax.ShapeDtypeStruct((B, d_out_pad), jnp.float32),
            grid=(num_tiles,),
            in_specs=in_specs,
            out_specs=out_spec,
            compiler_params=pltpu.CompilerParams(
                # Batch tiles are independent -> shard across TCs on v7x.
                dimension_semantics=("parallel",),
                vmem_limit_bytes=min(max(est_vmem(weight_bufs), 32 * 1024 * 1024), budget),
            ),
        )(x, *flat_params)

    try:
        out_pad = build_and_run(True)
    except Exception:
        # pl.Buffered(1) single-buffering may be unsupported in some jax
        # versions; retry with default double-buffered specs.
        out_pad = build_and_run(False)

    return out_pad if d_out_pad == out_dim else out_pad[:, :out_dim]


class MLPPallas:
    """Mirror of the PyTorch MLP: Linear layers with Tanh between them
    (Dropout is identity in eval mode)."""

    def __init__(self, sizes, key, bias=True):
        self.sizes = tuple(sizes)
        self.padded_params = []   # per layer: (W^T bf16 (Kp,Np), bias f32 (1,Np))
        for i in range(len(sizes) - 1):
            key, wk, bk = jax.random.split(key, 3)
            fan_in = sizes[i]
            bound = 1.0 / (fan_in ** 0.5)
            # PyTorch nn.Linear default init: U(-bound, bound) for W and b.
            w = jax.random.uniform(
                wk, (sizes[i + 1], sizes[i]), jnp.float32, -bound, bound
            )
            if bias:
                b = jax.random.uniform(
                    bk, (sizes[i + 1],), jnp.float32, -bound, bound
                )
            else:
                b = jnp.zeros((sizes[i + 1],), jnp.float32)

            # K (contraction) dim: true size (padded only to 16) for layer 0;
            # deeper layers' K equals the previous layer's 128-padded output.
            # N (output) dims padded to 128 for lane-dense stores.  Zero
            # rows/cols + zero bias keep padded columns exactly 0 through tanh,
            # so padding never perturbs the valid outputs.
            k_pad = _round_up(sizes[i], 16) if i == 0 else _round_up(sizes[i], 128)
            n_pad = _round_up(sizes[i + 1], 128)
            w_pad = (
                jnp.zeros((k_pad, n_pad), jnp.bfloat16)
                .at[: sizes[i], : sizes[i + 1]]
                .set(w.T.astype(jnp.bfloat16))
            )
            b_pad = (
                jnp.zeros((1, n_pad), jnp.float32)
                .at[:, : sizes[i + 1]]
                .set(b.reshape(1, -1))
            )
            self.padded_params.append((w_pad, b_pad))

    def __call__(self, x):
        return mlp_forward(x, self.padded_params, out_dim=self.sizes[-1])


if __name__ == "__main__":
    key = jax.random.PRNGKey(0)
    key, xk = jax.random.split(key)

    sizes = (32, 64, 16)   # e.g. MLP((prefix_dim, hidden, out))
    batch = 8
    x = jax.random.normal(xk, (batch, sizes[0]), dtype=jnp.float32)

    mlp = MLPPallas(sizes, key)
    out = jax.block_until_ready(mlp(x))

    assert out.shape == (batch, sizes[-1]), out.shape
    assert out.dtype == jnp.float32

    # Reference: same math (bf16 weights/activations, f32 accumulation) in
    # plain JAX on the padded parameters, sliced back to the true width.
    d_in_pad = mlp.padded_params[0][0].shape[0]
    if d_in_pad == sizes[0]:
        x_ref = x
    else:
        x_ref = jnp.zeros((batch, d_in_pad), x.dtype).at[:, : sizes[0]].set(x)
    ref = _mlp_reference_jnp(x_ref, mlp.padded_params)[:, : sizes[-1]]
    assert jnp.allclose(out, ref, atol=2e-3, rtol=1e-3), float(
        jnp.max(jnp.abs(out - ref))
    )

    print("KERNEL_OK")
</pallas_src>

<mosaic_0001>
module attributes {stable_mosaic.version = 11 : i64} {
  func.func @_mlp_fused_kernel(%arg0: i32, %arg1: memref<8x32xf32, #tpu.memory_space<vmem>>, %arg2: memref<32x128xbf16, #tpu.memory_space<vmem>>, %arg3: memref<1x128xf32, #tpu.memory_space<vmem>>, %arg4: memref<128x128xbf16, #tpu.memory_space<vmem>>, %arg5: memref<1x128xf32, #tpu.memory_space<vmem>>, %arg6: memref<8x128xf32, #tpu.memory_space<vmem>>) attributes {dimension_semantics = [#tpu.dimension_semantics<parallel>], iteration_bounds = array<i64: 1>, scalar_prefetch = 0 : i64, scratch_operands = 0 : i64, tpu.core_type = #tpu.core_type<tc>, window_params = [{transform_indices = @transform_0, window_bounds = array<i64: 8, 32>}, {pipeline_mode = #tpu.pipeline_mode<synchronous>, transform_indices = @transform_1, window_bounds = array<i64: 32, 128>}, {pipeline_mode = #tpu.pipeline_mode<synchronous>, transform_indices = @transform_2, window_bounds = array<i64: 1, 128>}, {pipeline_mode = #tpu.pipeline_mode<synchronous>, transform_indices = @transform_3, window_bounds = array<i64: 128, 128>}, {pipeline_mode = #tpu.pipeline_mode<synchronous>, transform_indices = @transform_4, window_bounds = array<i64: 1, 128>}, {transform_indices = @transform_5, window_bounds = array<i64: 8, 128>}]} {
    %c0 = arith.constant 0 : index
    %c0_0 = arith.constant 0 : index
    %0 = vector.load %arg1[%c0, %c0_0] : memref<8x32xf32, #tpu.memory_space<vmem>>, vector<8x32xf32>
    %1 = arith.truncf %0 : vector<8x32xf32> to vector<8x32xbf16>
    %c0_1 = arith.constant 0 : index
    %c0_2 = arith.constant 0 : index
    %2 = vector.load %arg2[%c0_1, %c0_2] : memref<32x128xbf16, #tpu.memory_space<vmem>>, vector<32x128xbf16>
    %c0_3 = arith.constant 0 : index
    %c0_4 = arith.constant 0 : index
    %3 = vector.load %arg3[%c0_3, %c0_4] : memref<1x128xf32, #tpu.memory_space<vmem>>, vector<1x128xf32>
    %cst = arith.constant dense<0.000000e+00> : vector<8x128xf32>
    %4 = tpu.matmul %1, %2, %cst {dimension_numbers = #tpu.dot_dimension_numbers<[1], [0], [0], [1], [0, 0, 1, 1], [], []>} : vector<8x32xbf16>, vector<32x128xbf16>, vector<8x128xf32> -> vector<8x128xf32>
    %5 = vector.broadcast %3 : vector<1x128xf32> to vector<8x128xf32>
    %6 = arith.addf %4, %5 : vector<8x128xf32>
    %7 = math.tanh %6 : vector<8x128xf32>
    %8 = arith.truncf %7 : vector<8x128xf32> to vector<8x128xbf16>
    %c0_5 = arith.constant 0 : index
    %c0_6 = arith.constant 0 : index
    %9 = vector.load %arg4[%c0_5, %c0_6] : memref<128x128xbf16, #tpu.memory_space<vmem>>, vector<128x128xbf16>
    %c0_7 = arith.constant 0 : index
    %c0_8 = arith.constant 0 : index
    %10 = vector.load %arg5[%c0_7, %c0_8] : memref<1x128xf32, #tpu.memory_space<vmem>>, vector<1x128xf32>
    %cst_9 = arith.constant dense<0.000000e+00> : vector<8x128xf32>
    %11 = tpu.matmul %8, %9, %cst_9 {dimension_numbers = #tpu.dot_dimension_numbers<[1], [0], [0], [1], [0, 0, 1, 1], [], []>} : vector<8x128xbf16>, vector<128x128xbf16>, vector<8x128xf32> -> vector<8x128xf32>
    %12 = vector.broadcast %10 : vector<1x128xf32> to vector<8x128xf32>
    %13 = arith.addf %11, %12 : vector<8x128xf32>
    %c0_10 = arith.constant 0 : index
    %c0_11 = arith.constant 0 : index
    %14 = vector.load %arg6[%c0_10, %c0_11] : memref<8x128xf32, #tpu.memory_space<vmem>>, vector<8x128xf32>
    tpu.vector_store %arg6[%c0_10, %c0_11], %13 {strides = array<i32>} : memref<8x128xf32, #tpu.memory_space<vmem>>, vector<8x128xf32>,
    return
  }
  func.func @transform_0(%arg0: i32) -> (i32, i32) {
    %c0_i32 = arith.constant 0 : i32
    %c0_i32_0 = arith.constant 0 : i32
    return %arg0, %c0_i32 : i32, i32
  }
  func.func @transform_1(%arg0: i32) -> (i32, i32) {
    %c0_i32 = arith.constant 0 : i32
    %c0_i32_0 = arith.constant 0 : i32
    %c0_i32_1 = arith.constant 0 : i32
    return %c0_i32, %c0_i32_0 : i32, i32
  }
  func.func @transform_2(%arg0: i32) -> (i32, i32) {
    %c0_i32 = arith.constant 0 : i32
    %c0_i32_0 = arith.constant 0 : i32
    %c0_i32_1 = arith.constant 0 : i32
    return %c0_i32, %c0_i32_0 : i32, i32
  }
  func.func @transform_3(%arg0: i32) -> (i32, i32) {
    %c0_i32 = arith.constant 0 : i32
    %c0_i32_0 = arith.constant 0 : i32
    %c0_i32_1 = arith.constant 0 : i32
    return %c0_i32, %c0_i32_0 : i32, i32
  }
  func.func @transform_4(%arg0: i32) -> (i32, i32) {
    %c0_i32 = arith.constant 0 : i32
    %c0_i32_0 = arith.constant 0 : i32
    %c0_i32_1 = arith.constant 0 : i32
    return %c0_i32, %c0_i32_0 : i32, i32
  }
  func.func @transform_5(%arg0: i32) -> (i32, i32) {
    %c0_i32 = arith.constant 0 : i32
    %c0_i32_0 = arith.constant 0 : i32
    return %arg0, %c0_i32 : i32, i32
  }
}

module attributes {stable_mosaic.version = 11 : i64} {
  func.func @_mlp_fused_kernel(%arg0: i32, %arg1: memref<8x32xf32, #tpu.memory_space<vmem>>, %arg2: memref<32x128xbf16, #tpu.memory_space<vmem>>, %arg3: memref<1x128xf32, #tpu.memory_space<vmem>>, %arg4: memref<128x128xbf16, #tpu.memory_space<vmem>>, %arg5: memref<1x128xf32, #tpu.memory_space<vmem>>, %arg6: memref<8x128xf32, #tpu.memory_space<vmem>>) attributes {dimension_semantics = [#tpu.dimension_semantics<parallel>], iteration_bounds = array<i64: 1>, scalar_prefetch = 0 : i64, scratch_operands = 0 : i64, tpu.core_type = #tpu.core_type<tc>, window_params = [{transform_indices = @transform_0, window_bounds = array<i64: 8, 32>}, {pipeline_mode = #tpu.pipeline_mode<synchronous>, transform_indices = @transform_1, window_bounds = array<i64: 32, 128>}, {pipeline_mode = #tpu.pipeline_mode<synchronous>, transform_indices = @transform_2, window_bounds = array<i64: 1, 128>}, {pipeline_mode = #tpu.pipeline_mode<synchronous>, transform_indices = @transform_3, window_bounds = array<i64: 128, 128>}, {pipeline_mode = #tpu.pipeline_mode<synchronous>, transform_indices = @transform_4, window_bounds = array<i64: 1, 128>}, {transform_indices = @transform_5, window_bounds = array<i64: 8, 128>}]} {
    %c0 = arith.constant 0 : index
    %c0_0 = arith.constant 0 : index
    %0 = vector.load %arg1[%c0, %c0_0] : memref<8x32xf32, #tpu.memory_space<vmem>>, vector<8x32xf32>
    %1 = arith.truncf %0 : vector<8x32xf32> to vector<8x32xbf16>
    %c0_1 = arith.constant 0 : index
    %c0_2 = arith.constant 0 : index
    %2 = vector.load %arg2[%c0_1, %c0_2] : memref<32x128xbf16, #tpu.memory_space<vmem>>, vector<32x128xbf16>
    %c0_3 = arith.constant 0 : index
    %c0_4 = arith.constant 0 : index
    %3 = vector.load %arg3[%c0_3, %c0_4] : memref<1x128xf32, #tpu.memory_space<vmem>>, vector<1x128xf32>
    %cst = arith.constant dense<0.000000e+00> : vector<8x128xf32>
    %4 = tpu.matmul %1, %2, %cst {dimension_numbers = #tpu.dot_dimension_numbers<[1], [0], [0], [1], [0, 0, 1, 1], [], []>} : vector<8x32xbf16>, vector<32x128xbf16>, vector<8x128xf32> -> vector<8x128xf32>
    %5 = vector.broadcast %3 : vector<1x128xf32> to vector<8x128xf32>
    %6 = arith.addf %4, %5 : vector<8x128xf32>
    %7 = math.tanh %6 : vector<8x128xf32>
    %8 = arith.truncf %7 : vector<8x128xf32> to vector<8x128xbf16>
    %c0_5 = arith.constant 0 : index
    %c0_6 = arith.constant 0 : index
    %9 = vector.load %arg4[%c0_5, %c0_6] : memref<128x128xbf16, #tpu.memory_space<vmem>>, vector<128x128xbf16>
    %c0_7 = arith.constant 0 : index
    %c0_8 = arith.constant 0 : index
    %10 = vector.load %arg5[%c0_7, %c0_8] : memref<1x128xf32, #tpu.memory_space<vmem>>, vector<1x128xf32>
    %cst_9 = arith.constant dense<0.000000e+00> : vector<8x128xf32>
    %11 = tpu.matmul %8, %9, %cst_9 {dimension_numbers = #tpu.dot_dimension_numbers<[1], [0], [0], [1], [0, 0, 1, 1], [], []>} : vector<8x128xbf16>, vector<128x128xbf16>, vector<8x128xf32> -> vector<8x128xf32>
    %12 = vector.broadcast %10 : vector<1x128xf32> to vector<8x128xf32>
    %13 = arith.addf %11, %12 : vector<8x128xf32>
    %c0_10 = arith.constant 0 : index
    %c0_11 = arith.constant 0 : index
    %14 = vector.load %arg6[%c0_10, %c0_11] : memref<8x128xf32, #tpu.memory_space<vmem>>, vector<8x128xf32>
    tpu.vector_store %arg6[%c0_10, %c0_11], %13 {strides = array<i32>} : memref<8x128xf32, #tpu.memory_space<vmem>>, vector<8x128xf32>,
    return
  }
  func.func @transform_0(%arg0: i32) -> (i32, i32) {
    %c0_i32 = arith.constant 0 : i32
    %c0_i32_0 = arith.constant 0 : i32
    return %arg0, %c0_i32 : i32, i32
  }
  func.func @transform_1(%arg0: i32) -> (i32, i32) {
    %c0_i32 = arith.constant 0 : i32
    %c0_i32_0 = arith.constant 0 : i32
    %c0_i32_1 = arith.constant 0 : i32
    return %c0_i32, %c0_i32_0 : i32, i32
  }
  func.func @transform_2(%arg0: i32) -> (i32, i32) {
    %c0_i32 = arith.constant 0 : i32
    %c0_i32_0 = arith.constant 0 : i32
    %c0_i32_1 = arith.constant 0 : i32
    return %c0_i32, %c0_i32_0 : i32, i32
  }
  func.func @transform_3(%arg0: i32) -> (i32, i32) {
    %c0_i32 = arith.constant 0 : i32
    %c0_i32_0 = arith.constant 0 : i32
    %c0_i32_1 = arith.constant 0 : i32
    return %c0_i32, %c0_i32_0 : i32, i32
  }
  func.func @transform_4(%arg0: i32) -> (i32, i32) {
    %c0_i32 = arith.constant 0 : i32
    %c0_i32_0 = arith.constant 0 : i32
    %c0_i32_1 = arith.constant 0 : i32
    return %c0_i32, %c0_i32_0 : i32, i32
  }
  func.func @transform_5(%arg0: i32) -> (i32, i32) {
    %c0_i32 = arith.constant 0 : i32
    %c0_i32_0 = arith.constant 0 : i32
    return %arg0, %c0_i32 : i32, i32
  }
}

</mosaic_0001>

<llo_original>
// kernel: tpu_custom_call.1
$region0: #{tpu_custom_call.1}
  #allocation0 [shape = 'u32[]', space=smem, size = 0x4, offset = 0x4, fixed_abs, tag = 'smem constant byte address 0x4 - core index']
  #allocation1 [shape = 'u32[144,128]{1,0:T(1,128)}', space=vmem, size = 0x12000, scoped, tag = 'internal scratch']
  %s0 = inlined_call_operand.hbm [shape: f32[8,32], index: 0, kind: input, shape index: {}]
  %s1 = inlined_call_operand.hbm [shape: bf16[32,128], index: 1, kind: input, shape index: {}]
  %s2 = inlined_call_operand.vmem [shape: f32[1,128], index: 2, kind: input, shape index: {}]
  %s3 = inlined_call_operand.hbm [shape: bf16[128,128], index: 3, kind: input, shape index: {}]
  %s4 = inlined_call_operand.vmem [shape: f32[1,128], index: 4, kind: input, shape index: {}]
  %s5 = inlined_call_operand.hbm [shape: f32[8,128], index: 5, kind: output, shape index: {}]
  %s6 = sld [smem:[#allocation0]]
  $region42: #{tpu_custom_call.1} parent=0
    _
  %s8 = ssub.s32 1, %s6
  %s9 = scalar_select 0, %s8, %s6
  $region1: #{tpu_custom_call.1} parent=0
    #allocation2 [shape = 'u8[4096]{0}', space=vmem, size = 0x1000, scoped, tag = 'input window, operand 0, single buffered']
    #allocation3 [shape = 's32[1]{0}', space=sflag, size = 0x4, scoped, tag = 'scoped memory for tpu_custom_call.1']
    #allocation4 [shape = 's32[1]{0}', space=sflag, size = 0x4, scoped, tag = 'scoped memory for tpu_custom_call.1']
    #allocation5 [shape = 'u8[8192]{0}', space=vmem, size = 0x2000, scoped, tag = 'input window, operand 1, single buffered']
    #allocation6 [shape = 's32[1]{0}', space=sflag, size = 0x4, scoped, tag = 'scoped memory for tpu_custom_call.1']
    #allocation7 [shape = 'u8[32768]{0}', space=vmem, size = 0x8000, scoped, tag = 'input window, operand 3, single buffered']
    #allocation8 [shape = 'u8[4096]{0}', space=vmem, size = 0x1000, scoped, tag = 'output window, operand 0, single buffered']
    %10 = vsyncpa [#allocation3], 0
    %11 = vsyncpa [#allocation6], 0
    %12 = vsyncpa [#allocation4], 0
    // Predicated region
    $region2: #{tpu_custom_call.1} parent=1 // pred_check
      _
    $region3: #{tpu_custom_call.1} parent=1 // pred_check_branch
      %14 = sbr.rel (0) target = $region5
    $region4: #{tpu_custom_call.1} parent=1 // pred_region
      %s16 = ssub.s32 128, 128
      %17 = vsyncadd [#allocation3], %s16
      %s19 = sshll.u32 [#allocation2], 4
      %s20 = int_to_ptr.vmem [resolvable:$true] %s19
      %22 = dma.hbm_to_vmem [thread:$0]  %s0, 128, %s20, [#allocation3]
    $region5: #{tpu_custom_call.1} parent=1 // pred_fallthru
      _
    // Predicated region
    $region6: #{tpu_custom_call.1} parent=1 // pred_check
      _
    $region7: #{tpu_custom_call.1} parent=1 // pred_check_branch
      %24 = sbr.rel (0) target = $region9
    $region8: #{tpu_custom_call.1} parent=1 // pred_region
      %s26 = ssub.s32 256, 256
      %27 = vsyncadd [#allocation6], %s26
      %s28 = sshll.u32 [#allocation5], 4
      %s29 = int_to_ptr.vmem [resolvable:$true] %s28
      %34 = dma.hbm_to_vmem [thread:$0]  %s1, 256, %s29, [#allocation6], 64, 64, 4
    $region9: #{tpu_custom_call.1} parent=1 // pred_fallthru
      _
    // Predicated region
    $region10: #{tpu_custom_call.1} parent=1 // pred_check
      _
    $region11: #{tpu_custom_call.1} parent=1 // pred_check_branch
      %36 = sbr.rel (0) target = $region13
    $region12: #{tpu_custom_call.1} parent=1 // pred_region
      _
    $region13: #{tpu_custom_call.1} parent=1 // pred_fallthru
      _
    // Predicated region
    $region14: #{tpu_custom_call.1} parent=1 // pred_check
      _
    $region15: #{tpu_custom_call.1} parent=1 // pred_check_branch
      %38 = sbr.rel (0) target = $region17
    $region16: #{tpu_custom_call.1} parent=1 // pred_region
      %s40 = ssub.s32 1024, 1024
      %41 = vsyncadd [#allocation6], %s40
      %s42 = sshll.u32 [#allocation7], 4
      %s43 = int_to_ptr.vmem [resolvable:$true] %s42
      %48 = dma.hbm_to_vmem [thread:$0]  %s3, 1024, %s43, [#allocation6], 64, 64, 4
    $region17: #{tpu_custom_call.1} parent=1 // pred_fallthru
      _
    // Predicated region
    $region18: #{tpu_custom_call.1} parent=1 // pred_check
      _
    $region19: #{tpu_custom_call.1} parent=1 // pred_check_branch
      %50 = sbr.rel (0) target = $region21
    $region20: #{tpu_custom_call.1} parent=1 // pred_region
      _
    $region21: #{tpu_custom_call.1} parent=1 // pred_fallthru
      _
    // Predicated region
    $region22: #{tpu_custom_call.1} parent=1 // pred_check
      _
    $region23: #{tpu_custom_call.1} parent=1 // pred_check_branch
      %52 = sbr.rel (0) target = $region25
    $region24: #{tpu_custom_call.1} parent=1 // pred_region
      %53 = dma.done [#allocation3], 128
    $region25: #{tpu_custom_call.1} parent=1 // pred_fallthru
      _
    // Predicated region
    $region26: #{tpu_custom_call.1} parent=1 // pred_check
      _
    $region27: #{tpu_custom_call.1} parent=1 // pred_check_branch
      %55 = sbr.rel (0) target = $region29
    $region28: #{tpu_custom_call.1} parent=1 // pred_region
      %56 = dma.done [#allocation6], 256
    $region29: #{tpu_custom_call.1} parent=1 // pred_fallthru
      _
    // Predicated region
    $region30: #{tpu_custom_call.1} parent=1 // pred_check
      _
    $region31: #{tpu_custom_call.1} parent=1 // pred_check_branch
      %58 = sbr.rel (0) target = $region33
    $region32: #{tpu_custom_call.1} parent=1 // pred_region
      %59 = dma.done [#allocation6], 1024
    $region33: #{tpu_custom_call.1} parent=1 // pred_fallthru
      _
    %v61 = vld [vmem:[#allocation2] sm:$0xff]
    %v62 = vpack.c.bf16 %v61, %v61
    %v63 = vld [vmem:[#allocation5] sm:$0xf]
    %v64 = vld [vmem:[#allocation5 + $0x4] sm:$0xf]
    %v65 = vld [vmem:[#allocation5 + $0x8] sm:$0xf]
    %v66 = vld [vmem:[#allocation5 + $0xc] sm:$0xf]
    %v67 = vld [vmem:[%s2] sm:$0x1]
    %v69 = vlaneseq
    %v70 = vshrl.u32 %v69, 7
    %v71 = vsub.s32 0, %v70
    %v72 = vrot.slane %v67, %v71
    %v78 = vunpack.c.l.b16 %v63
    %v79 = vunpack.c.l.b16 %v64
    %v80 = vunpack.c.l.b16 %v65
    %v81 = vunpack.c.l.b16 %v66
    %v82 = vpack.c.b16 %v79, %v78
    %v83 = vpack.c.b16 %v81, %v80
    %vm86 = vcmask 261120
    %v88 = vsel %vm86, %v62, 0
    %90 = vmatprep.subr.bf16.mxu0 0
    %91 = vmatpush1.bf16.msra.mxu0 %v82
    %92 = vmatprep.subr.bf16.mxu0 0
    %93 = vmatpush1.bf16.msra.mxu0 %v83
    %94 = vmatprep.subr.bf16.mxu0 0
    %95 = vmatpush1.bf16.msra.mxu0 0
    %96 = vmatprep.subr.bf16.mxu0 0
    %97 = vmatpush1.bf16.msra.mxu0 0
    %98 = vmatprep.subr.bf16.mxu0 0
    %99 = vmatpush1.bf16.msra.mxu0 0
    %100 = vmatprep.subr.bf16.mxu0 0
    %101 = vmatpush1.bf16.msra.mxu0 0
    %102 = vmatprep.subr.bf16.mxu0 0
    %103 = vmatpush1.bf16.msra.mxu0 0
    %104 = vmatprep.subr.bf16.mxu0 0
    %105 = vmatpush1.bf16.msra.mxu0 0
    %106 = vmatprep.subr.bf16.mxu0 0
    %107 = vmatpush1.bf16.msra.mxu0 0
    %108 = vmatprep.subr.bf16.mxu0 0
    %109 = vmatpush1.bf16.msra.mxu0 0
    %110 = vmatprep.subr.bf16.mxu0 0
    %111 = vmatpush1.bf16.msra.mxu0 0
    %112 = vmatprep.subr.bf16.mxu0 0
    %113 = vmatpush1.bf16.msra.mxu0 0
    %114 = vmatprep.subr.bf16.mxu0 0
    %115 = vmatpush1.bf16.msra.mxu0 0
    %116 = vmatprep.subr.bf16.mxu0 0
    %117 = vmatpush1.bf16.msra.mxu0 0
    %118 = vmatprep.subr.bf16.mxu0 0
    %119 = vmatpush1.bf16.msra.mxu0 0
    %120 = vmatprep.subr.bf16.mxu0 0
    %121 = vmatpush1.bf16.msra.mxu0 0
    %122 = vmatprep.mubr.bf16.mxu0 0
    %123 = vmatmul.mubr.bf16.gmra.mrb[0].mxu0 %v88
    %v124 = vpop.f32.mrb[0].mxu0
    %v125 = vadd.f32 %v72, %v124
    %v126 = vpop.f32.mrb[0].mxu0
    %v127 = vpop.f32.mrb[0].mxu0
    %v128 = vpop.f32.mrb[0].mxu0
    %129 = vdwg.mxu0
    %v130 = vtanh.pop %v125
    %v131 = vpack.c.bf16 %v130, %v130
    %v132 = vld [vmem:[#allocation7] sm:$0xf]
    %v133 = vld [vmem:[#allocation7 + $0x4] sm:$0xf]
    %v134 = vld [vmem:[#allocation7 + $0x8] sm:$0xf]
    %v135 = vld [vmem:[#allocation7 + $0xc] sm:$0xf]
    %v136 = vld [vmem:[#allocation7 + $0x10] sm:$0xf]
    %v137 = vld [vmem:[#allocation7 + $0x14] sm:$0xf]
    %v138 = vld [vmem:[#allocation7 + $0x18] sm:$0xf]
    %v139 = vld [vmem:[#allocation7 + $0x1c] sm:$0xf]
    %v140 = vld [vmem:[#allocation7 + $0x20] sm:$0xf]
    %v141 = vld [vmem:[#allocation7 + $0x24] sm:$0xf]
    %v142 = vld [vmem:[#allocation7 + $0x28] sm:$0xf]
    %v143 = vld [vmem:[#allocation7 + $0x2c] sm:$0xf]
    %v144 = vld [vmem:[#allocation7 + $0x30] sm:$0xf]
    %v145 = vld [vmem:[#allocation7 + $0x34] sm:$0xf]
    %v146 = vld [vmem:[#allocation7 + $0x38] sm:$0xf]
    %v147 = vld [vmem:[#allocation7 + $0x3c] sm:$0xf]
    %v148 = vld [vmem:[%s4] sm:$0x1]
    %v150 = vlaneseq
    %v151 = vshrl.u32 %v150, 7
    %v152 = vsub.s32 0, %v151
    %v153 = vrot.slane %v148, %v152
    %v171 = vunpack.c.l.b16 %v132
    %v172 = vunpack.c.l.b16 %v133
    %v173 = vunpack.c.l.b16 %v134
    %v174 = vunpack.c.l.b16 %v135
    %v175 = vunpack.c.l.b16 %v136
    %v176 = vunpack.c.l.b16 %v137
    %v177 = vunpack.c.l.b16 %v138
    %v178 = vunpack.c.l.b16 %v139
    %v179 = vunpack.c.l.b16 %v140
    %v180 = vunpack.c.l.b16 %v141
    %v181 = vunpack.c.l.b16 %v142
    %v182 = vunpack.c.l.b16 %v143
    %v183 = vunpack.c.l.b16 %v144
    %v184 = vunpack.c.l.b16 %v145
    %v185 = vunpack.c.l.b16 %v146
    %v186 = vunpack.c.l.b16 %v147
    %v187 = vpack.c.b16 %v172, %v171
    %v188 = vpack.c.b16 %v174, %v173
    %v189 = vpack.c.b16 %v176, %v175
    %v190 = vpack.c.b16 %v178, %v177
    %v191 = vpack.c.b16 %v180, %v179
    %v192 = vpack.c.b16 %v182, %v181
    %v193 = vpack.c.b16 %v184, %v183
    %v194 = vpack.c.b16 %v186, %v185
    %203 = vmatprep.subr.bf16.mxu0 0
    %204 = vmatpush1.bf16.msra.mxu0 %v187
    %205 = vmatprep.subr.bf16.mxu0 0
    %206 = vmatpush1.bf16.msra.mxu0 %v188
    %207 = vmatprep.subr.bf16.mxu0 0
    %208 = vmatpush1.bf16.msra.mxu0 %v189
    %209 = vmatprep.subr.bf16.mxu0 0
    %210 = vmatpush1.bf16.msra.mxu0 %v190
    %211 = vmatprep.subr.bf16.mxu0 0
    %212 = vmatpush1.bf16.msra.mxu0 %v191
    %213 = vmatprep.subr.bf16.mxu0 0
    %214 = vmatpush1.bf16.msra.mxu0 %v192
    %215 = vmatprep.subr.bf16.mxu0 0
    %216 = vmatpush1.bf16.msra.mxu0 %v193
    %217 = vmatprep.subr.bf16.mxu0 0
    %218 = vmatpush1.bf16.msra.mxu0 %v194
    %219 = vmatprep.subr.bf16.mxu0 0
    %220 = vmatpush1.bf16.msra.mxu0 0
    %221 = vmatprep.subr.bf16.mxu0 0
    %222 = vmatpush1.bf16.msra.mxu0 0
    %223 = vmatprep.subr.bf16.mxu0 0
    %224 = vmatpush1.bf16.msra.mxu0 0
    %225 = vmatprep.subr.bf16.mxu0 0
    %226 = vmatpush1.bf16.msra.mxu0 0
    %227 = vmatprep.subr.bf16.mxu0 0
    %228 = vmatpush1.bf16.msra.mxu0 0
    %229 = vmatprep.subr.bf16.mxu0 0
    %230 = vmatpush1.bf16.msra.mxu0 0
    %231 = vmatprep.subr.bf16.mxu0 0
    %232 = vmatpush1.bf16.msra.mxu0 0
    %233 = vmatprep.subr.bf16.mxu0 0
    %234 = vmatpush1.bf16.msra.mxu0 0
    %235 = vmatprep.mubr.bf16.mxu0 0
    %236 = vmatmul.mubr.bf16.gmra.mrb[0].mxu0 %v131
    %v237 = vpop.f32.mrb[0].mxu0
    %v238 = vadd.f32 %v153, %v237
    %v239 = vpop.f32.mrb[0].mxu0
    %v240 = vpop.f32.mrb[0].mxu0
    %v241 = vpop.f32.mrb[0].mxu0
    %242 = vdwg.mxu0
    %243 = vst [vmem:[#allocation8] sm:$0xff] %v238
    // Predicated region
    $region34: #{tpu_custom_call.1} parent=1 // pred_check
      _
    $region35: #{tpu_custom_call.1} parent=1 // pred_check_branch
      %245 = sbr.rel (0) target = $region37
    $region36: #{tpu_custom_call.1} parent=1 // pred_region
      %s247 = ssub.s32 128, 128
      %248 = vsyncadd [#allocation4], %s247
      %s250 = sshll.u32 [#allocation8], 4
      %s251 = int_to_ptr.vmem [resolvable:$true] %s250
      %253 = dma.vmem_to_hbm [thread:$0]  %s251, 128, %s5, [#allocation4]
    $region37: #{tpu_custom_call.1} parent=1 // pred_fallthru
      _
    // Predicated region
    $region38: #{tpu_custom_call.1} parent=1 // pred_check
      _
    $region39: #{tpu_custom_call.1} parent=1 // pred_check_branch
      %255 = sbr.rel (0) target = $region41
    $region40: #{tpu_custom_call.1} parent=1 // pred_region
      %256 = dma.done [#allocation4], 128
    $region41: #{tpu_custom_call.1} parent=1 // pred_fallthru
      _
    %257 = vsyncpa [#allocation3], 1
    %258 = vsyncpa [#allocation6], 1
    %259 = vsyncpa [#allocation4], 1

// kernel: tpu_custom_call.1
$region0: #{tpu_custom_call.1}
  #allocation0 [shape = 'u32[]', space=smem, size = 0x4, offset = 0x4, fixed_abs, tag = 'smem constant byte address 0x4 - core index']
  #allocation1 [shape = 'u32[144,128]{1,0:T(1,128)}', space=vmem, size = 0x12000, scoped, tag = 'internal scratch']
  %s0 = inlined_call_operand.hbm [shape: f32[8,32], index: 0, kind: input, shape index: {}]
  %s1 = inlined_call_operand.hbm [shape: bf16[32,128], index: 1, kind: input, shape index: {}]
  %s2 = inlined_call_operand.vmem [shape: f32[1,128], index: 2, kind: input, shape index: {}]
  %s3 = inlined_call_operand.hbm [shape: bf16[128,128], index: 3, kind: input, shape index: {}]
  %s4 = inlined_call_operand.vmem [shape: f32[1,128], index: 4, kind: input, shape index: {}]
  %s5 = inlined_call_operand.hbm [shape: f32[8,128], index: 5, kind: output, shape index: {}]
  %s6 = sld [smem:[#allocation0]]
  $region42: #{tpu_custom_call.1} parent=0
    _
  %s8 = ssub.s32 1, %s6
  %s9 = scalar_select 0, %s8, %s6
  $region1: #{tpu_custom_call.1} parent=0
    #allocation2 [shape = 'u8[4096]{0}', space=vmem, size = 0x1000, scoped, tag = 'input window, operand 0, single buffered']
    #allocation3 [shape = 's32[1]{0}', space=sflag, size = 0x4, scoped, tag = 'scoped memory for tpu_custom_call.1']
    #allocation4 [shape = 's32[1]{0}', space=sflag, size = 0x4, scoped, tag = 'scoped memory for tpu_custom_call.1']
    #allocation5 [shape = 'u8[8192]{0}', space=vmem, size = 0x2000, scoped, tag = 'input window, operand 1, single buffered']
    #allocation6 [shape = 's32[1]{0}', space=sflag, size = 0x4, scoped, tag = 'scoped memory for tpu_custom_call.1']
    #allocation7 [shape = 'u8[32768]{0}', space=vmem, size = 0x8000, scoped, tag = 'input window, operand 3, single buffered']
    #allocation8 [shape = 'u8[4096]{0}', space=vmem, size = 0x1000, scoped, tag = 'output window, operand 0, single buffered']
    %10 = vsyncpa [#allocation3], 0
    %11 = vsyncpa [#allocation6], 0
    %12 = vsyncpa [#allocation4], 0
    // Predicated region
    $region2: #{tpu_custom_call.1} parent=1 // pred_check
      _
    $region3: #{tpu_custom_call.1} parent=1 // pred_check_branch
      %14 = sbr.rel (0) target = $region5
    $region4: #{tpu_custom_call.1} parent=1 // pred_region
      %s16 = ssub.s32 128, 128
      %17 = vsyncadd [#allocation3], %s16
      %s19 = sshll.u32 [#allocation2], 4
      %s20 = int_to_ptr.vmem [resolvable:$true] %s19
      %22 = dma.hbm_to_vmem [thread:$0]  %s0, 128, %s20, [#allocation3]
    $region5: #{tpu_custom_call.1} parent=1 // pred_fallthru
      _
    // Predicated region
    $region6: #{tpu_custom_call.1} parent=1 // pred_check
      _
    $region7: #{tpu_custom_call.1} parent=1 // pred_check_branch
      %24 = sbr.rel (0) target = $region9
    $region8: #{tpu_custom_call.1} parent=1 // pred_region
      %s26 = ssub.s32 256, 256
      %27 = vsyncadd [#allocation6], %s26
      %s28 = sshll.u32 [#allocation5], 4
      %s29 = int_to_ptr.vmem [resolvable:$true] %s28
      %34 = dma.hbm_to_vmem [thread:$0]  %s1, 256, %s29, [#allocation6], 64, 64, 4
    $region9: #{tpu_custom_call.1} parent=1 // pred_fallthru
      _
    // Predicated region
    $region10: #{tpu_custom_call.1} parent=1 // pred_check
      _
    $region11: #{tpu_custom_call.1} parent=1 // pred_check_branch
      %36 = sbr.rel (0) target = $region13
    $region12: #{tpu_custom_call.1} parent=1 // pred_region
      _
    $region13: #{tpu_custom_call.1} parent=1 // pred_fallthru
      _
    // Predicated region
    $region14: #{tpu_custom_call.1} parent=1 // pred_check
      _
    $region15: #{tpu_custom_call.1} parent=1 // pred_check_branch
      %38 = sbr.rel (0) target = $region17
    $region16: #{tpu_custom_call.1} parent=1 // pred_region
      %s40 = ssub.s32 1024, 1024
      %41 = vsyncadd [#allocation6], %s40
      %s42 = sshll.u32 [#allocation7], 4
      %s43 = int_to_ptr.vmem [resolvable:$true] %s42
      %48 = dma.hbm_to_vmem [thread:$0]  %s3, 1024, %s43, [#allocation6], 64, 64, 4
    $region17: #{tpu_custom_call.1} parent=1 // pred_fallthru
      _
    // Predicated region
    $region18: #{tpu_custom_call.1} parent=1 // pred_check
      _
    $region19: #{tpu_custom_call.1} parent=1 // pred_check_branch
      %50 = sbr.rel (0) target = $region21
    $region20: #{tpu_custom_call.1} parent=1 // pred_region
      _
    $region21: #{tpu_custom_call.1} parent=1 // pred_fallthru
      _
    // Predicated region
    $region22: #{tpu_custom_call.1} parent=1 // pred_check
      _
    $region23: #{tpu_custom_call.1} parent=1 // pred_check_branch
      %52 = sbr.rel (0) target = $region25
    $region24: #{tpu_custom_call.1} parent=1 // pred_region
      %53 = dma.done [#allocation3], 128
    $region25: #{tpu_custom_call.1} parent=1 // pred_fallthru
      _
    // Predicated region
    $region26: #{tpu_custom_call.1} parent=1 // pred_check
      _
    $region27: #{tpu_custom_call.1} parent=1 // pred_check_branch
      %55 = sbr.rel (0) target = $region29
    $region28: #{tpu_custom_call.1} parent=1 // pred_region
      %56 = dma.done [#allocation6], 256
    $region29: #{tpu_custom_call.1} parent=1 // pred_fallthru
      _
    // Predicated region
    $region30: #{tpu_custom_call.1} parent=1 // pred_check
      _
    $region31: #{tpu_custom_call.1} parent=1 // pred_check_branch
      %58 = sbr.rel (0) target = $region33
    $region32: #{tpu_custom_call.1} parent=1 // pred_region
      %59 = dma.done [#allocation6], 1024
    $region33: #{tpu_custom_call.1} parent=1 // pred_fallthru
      _
    %v61 = vld [vmem:[#allocation2] sm:$0xff]
    %v62 = vpack.c.bf16 %v61, %v61
    %v63 = vld [vmem:[#allocation5] sm:$0xf]
    %v64 = vld [vmem:[#allocation5 + $0x4] sm:$0xf]
    %v65 = vld [vmem:[#allocation5 + $0x8] sm:$0xf]
    %v66 = vld [vmem:[#allocation5 + $0xc] sm:$0xf]
    %v67 = vld [vmem:[%s2] sm:$0x1]
    %v69 = vlaneseq
    %v70 = vshrl.u32 %v69, 7
    %v71 = vsub.s32 0, %v70
    %v72 = vrot.slane %v67, %v71
    %v78 = vunpack.c.l.b16 %v63
    %v79 = vunpack.c.l.b16 %v64
    %v80 = vunpack.c.l.b16 %v65
    %v81 = vunpack.c.l.b16 %v66
    %v82 = vpack.c.b16 %v79, %v78
    %v83 = vpack.c.b16 %v81, %v80
    %vm86 = vcmask 261120
    %v88 = vsel %vm86, %v62, 0
    %90 = vmatprep.subr.bf16.mxu0 0
    %91 = vmatpush1.bf16.msra.mxu0 %v82
    %92 = vmatprep.subr.bf16.mxu0 0
    %93 = vmatpush1.bf16.msra.mxu0 %v83
    %94 = vmatprep.subr.bf16.mxu0 0
    %95 = vmatpush1.bf16.msra.mxu0 0
    %96 = vmatprep.subr.bf16.mxu0 0
    %97 = vmatpush1.bf16.msra.mxu0 0
    %98 = vmatprep.subr.bf16.mxu0 0
    %99 = vmatpush1.bf16.msra.mxu0 0
    %100 = vmatprep.subr.bf16.mxu0 0
    %101 = vmatpush1.bf16.msra.mxu0 0
    %102 = vmatprep.subr.bf16.mxu0 0
    %103 = vmatpush1.bf16.msra.mxu0 0
    %104 = vmatprep.subr.bf16.mxu0 0
    %105 = vmatpush1.bf16.msra.mxu0 0
    %106 = vmatprep.subr.bf16.mxu0 0
    %107 = vmatpush1.bf16.msra.mxu0 0
    %108 = vmatprep.subr.bf16.mxu0 0
    %109 = vmatpush1.bf16.msra.mxu0 0
    %110 = vmatprep.subr.bf16.mxu0 0
    %111 = vmatpush1.bf16.msra.mxu0 0
    %112 = vmatprep.subr.bf16.mxu0 0
    %113 = vmatpush1.bf16.msra.mxu0 0
    %114 = vmatprep.subr.bf16.mxu0 0
    %115 = vmatpush1.bf16.msra.mxu0 0
    %116 = vmatprep.subr.bf16.mxu0 0
    %117 = vmatpush1.bf16.msra.mxu0 0
    %118 = vmatprep.subr.bf16.mxu0 0
    %119 = vmatpush1.bf16.msra.mxu0 0
    %120 = vmatprep.subr.bf16.mxu0 0
    %121 = vmatpush1.bf16.msra.mxu0 0
    %122 = vmatprep.mubr.bf16.mxu0 0
    %123 = vmatmul.mubr.bf16.gmra.mrb[0].mxu0 %v88
    %v124 = vpop.f32.mrb[0].mxu0
    %v125 = vadd.f32 %v72, %v124
    %v126 = vpop.f32.mrb[0].mxu0
    %v127 = vpop.f32.mrb[0].mxu0
    %v128 = vpop.f32.mrb[0].mxu0
    %129 = vdwg.mxu0
    %v130 = vtanh.pop %v125
    %v131 = vpack.c.bf16 %v130, %v130
    %v132 = vld [vmem:[#allocation7] sm:$0xf]
    %v133 = vld [vmem:[#allocation7 + $0x4] sm:$0xf]
    %v134 = vld [vmem:[#allocation7 + $0x8] sm:$0xf]
    %v135 = vld [vmem:[#allocation7 + $0xc] sm:$0xf]
    %v136 = vld [vmem:[#allocation7 + $0x10] sm:$0xf]
    %v137 = vld [vmem:[#allocation7 + $0x14] sm:$0xf]
    %v138 = vld [vmem:[#allocation7 + $0x18] sm:$0xf]
    %v139 = vld [vmem:[#allocation7 + $0x1c] sm:$0xf]
    %v140 = vld [vmem:[#allocation7 + $0x20] sm:$0xf]
    %v141 = vld [vmem:[#allocation7 + $0x24] sm:$0xf]
    %v142 = vld [vmem:[#allocation7 + $0x28] sm:$0xf]
    %v143 = vld [vmem:[#allocation7 + $0x2c] sm:$0xf]
    %v144 = vld [vmem:[#allocation7 + $0x30] sm:$0xf]
    %v145 = vld [vmem:[#allocation7 + $0x34] sm:$0xf]
    %v146 = vld [vmem:[#allocation7 + $0x38] sm:$0xf]
    %v147 = vld [vmem:[#allocation7 + $0x3c] sm:$0xf]
    %v148 = vld [vmem:[%s4] sm:$0x1]
    %v150 = vlaneseq
    %v151 = vshrl.u32 %v150, 7
    %v152 = vsub.s32 0, %v151
    %v153 = vrot.slane %v148, %v152
    %v171 = vunpack.c.l.b16 %v132
    %v172 = vunpack.c.l.b16 %v133
    %v173 = vunpack.c.l.b16 %v134
    %v174 = vunpack.c.l.b16 %v135
    %v175 = vunpack.c.l.b16 %v136
    %v176 = vunpack.c.l.b16 %v137
    %v177 = vunpack.c.l.b16 %v138
    %v178 = vunpack.c.l.b16 %v139
    %v179 = vunpack.c.l.b16 %v140
    %v180 = vunpack.c.l.b16 %v141
    %v181 = vunpack.c.l.b16 %v142
    %v182 = vunpack.c.l.b16 %v143
    %v183 = vunpack.c.l.b16 %v144
    %v184 = vunpack.c.l.b16 %v145
    %v185 = vunpack.c.l.b16 %v146
    %v186 = vunpack.c.l.b16 %v147
    %v187 = vpack.c.b16 %v172, %v171
    %v188 = vpack.c.b16 %v174, %v173
    %v189 = vpack.c.b16 %v176, %v175
    %v190 = vpack.c.b16 %v178, %v177
    %v191 = vpack.c.b16 %v180, %v179
    %v192 = vpack.c.b16 %v182, %v181
    %v193 = vpack.c.b16 %v184, %v183
    %v194 = vpack.c.b16 %v186, %v185
    %203 = vmatprep.subr.bf16.mxu0 0
    %204 = vmatpush1.bf16.msra.mxu0 %v187
    %205 = vmatprep.subr.bf16.mxu0 0
    %206 = vmatpush1.bf16.msra.mxu0 %v188
    %207 = vmatprep.subr.bf16.mxu0 0
    %208 = vmatpush1.bf16.msra.mxu0 %v189
    %209 = vmatprep.subr.bf16.mxu0 0
    %210 = vmatpush1.bf16.msra.mxu0 %v190
    %211 = vmatprep.subr.bf16.mxu0 0
    %212 = vmatpush1.bf16.msra.mxu0 %v191
    %213 = vmatprep.subr.bf16.mxu0 0
    %214 = vmatpush1.bf16.msra.mxu0 %v192
    %215 = vmatprep.subr.bf16.mxu0 0
    %216 = vmatpush1.bf16.msra.mxu0 %v193
    %217 = vmatprep.subr.bf16.mxu0 0
    %218 = vmatpush1.bf16.msra.mxu0 %v194
    %219 = vmatprep.subr.bf16.mxu0 0
    %220 = vmatpush1.bf16.msra.mxu0 0
    %221 = vmatprep.subr.bf16.mxu0 0
    %222 = vmatpush1.bf16.msra.mxu0 0
    %223 = vmatprep.subr.bf16.mxu0 0
    %224 = vmatpush1.bf16.msra.mxu0 0
    %225 = vmatprep.subr.bf16.mxu0 0
    %226 = vmatpush1.bf16.msra.mxu0 0
    %227 = vmatprep.subr.bf16.mxu0 0
    %228 = vmatpush1.bf16.msra.mxu0 0
    %229 = vmatprep.subr.bf16.mxu0 0
    %230 = vmatpush1.bf16.msra.mxu0 0
    %231 = vmatprep.subr.bf16.mxu0 0
    %232 = vmatpush1.bf16.msra.mxu0 0
    %233 = vmatprep.subr.bf16.mxu0 0
    %234 = vmatpush1.bf16.msra.mxu0 0
    %235 = vmatprep.mubr.bf16.mxu0 0
    %236 = vmatmul.mubr.bf16.gmra.mrb[0].mxu0 %v131
    %v237 = vpop.f32.mrb[0].mxu0
    %v238 = vadd.f32 %v153, %v237
    %v239 = vpop.f32.mrb[0].mxu0
    %v240 = vpop.f32.mrb[0].mxu0
    %v241 = vpop.f32.mrb[0].mxu0
    %242 = vdwg.mxu0
    %243 = vst [vmem:[#allocation8] sm:$0xff] %v238
    // Predicated region
    $region34: #{tpu_custom_call.1} parent=1 // pred_check
      _
    $region35: #{tpu_custom_call.1} parent=1 // pred_check_branch
      %245 = sbr.rel (0) target = $region37
    $region36: #{tpu_custom_call.1} parent=1 // pred_region
      %s247 = ssub.s32 128, 128
      %248 = vsyncadd [#allocation4], %s247
      %s250 = sshll.u32 [#allocation8], 4
      %s251 = int_to_ptr.vmem [resolvable:$true] %s250
      %253 = dma.vmem_to_hbm [thread:$0]  %s251, 128, %s5, [#allocation4]
    $region37: #{tpu_custom_call.1} parent=1 // pred_fallthru
      _
    // Predicated region
    $region38: #{tpu_custom_call.1} parent=1 // pred_check
      _
    $region39: #{tpu_custom_call.1} parent=1 // pred_check_branch
      %255 = sbr.rel (0) target = $region41
    $region40: #{tpu_custom_call.1} parent=1 // pred_region
      %256 = dma.done [#allocation4], 128
    $region41: #{tpu_custom_call.1} parent=1 // pred_fallthru
      _
    %257 = vsyncpa [#allocation3], 1
    %258 = vsyncpa [#allocation6], 1
    %259 = vsyncpa [#allocation4], 1

</llo_original>
